<compile_context>
chip_gen: v6e
topology: v6e:2x2x1
jax: 0.10.0
libtpu: 0.0.40
codegen_flags: <defaults>
</compile_context>

<pallas_src>
import functools

import jax
import jax.numpy as jnp
from jax.experimental import pallas as pl
from jax.experimental.pallas import tpu as pltpu

LANE = 128      # lane width: last dims padded to a multiple of this
SUBLANE = 8     # sublane width: second-to-last dims padded to a multiple of this


def _round_up(x, m):
    return (x + m - 1) // m * m


def _pad_to(arr, shape):
    return jnp.pad(arr, [(0, t - s) for s, t in zip(arr.shape, shape)])


# ---------------------------------------------------------------------------
# Pallas kernel: one grid step = one augmented view of the 2-layer GCN encoder
# + mean-pool readout.  Shared operands (A, X, W2, biases, P) use constant
# index_maps -> they stay resident in VMEM across the view axis; only the
# per-view W1 block (augmentation folded into the weights) is re-fetched.
# ---------------------------------------------------------------------------
def fused_gcn_kernel(a_ref, x_ref, w1_ref, b1_ref, w2_ref, b2_ref, p_ref,
                     z_ref, g_ref):
    a = a_ref[...]                                            # [N, N]  bf16 (shared)

    # Layer 1, reordered as A @ (X @ W1): per-view work is only the cheap
    # [N, F] @ [F, H] weight matmul.  MXU inputs bf16, accumulation f32.
    xw = jnp.dot(x_ref[...], w1_ref[...],
                 preferred_element_type=jnp.float32)          # [N, H] f32
    h1 = jnp.dot(a, xw.astype(jnp.bfloat16),
                 preferred_element_type=jnp.float32)          # [N, H] f32
    h1 = jnp.maximum(h1 + b1_ref[...], 0.0)                   # bias + ReLU in f32

    # Layer 2, reordered as A @ (H1 @ W2).
    hw = jnp.dot(h1.astype(jnp.bfloat16), w2_ref[...],
                 preferred_element_type=jnp.float32)          # [N, H] f32
    z = jnp.dot(a, hw.astype(jnp.bfloat16),
                preferred_element_type=jnp.float32) + b2_ref[...]
    z_ref[...] = z                                            # [N, H] f32, lane-dense

    # Graph readout (global mean pool) as an MXU matmul: g = P @ Z.
    g_ref[...] = jnp.dot(p_ref[...], z.astype(jnp.bfloat16),
                         preferred_element_type=jnp.float32)  # [G, H] f32


def fused_gcn_views(a_p, x_p, w1_views, b1_p, w2_p, b2_p, p_p):
    """Run all augmented views in ONE pallas_call with a parallel view grid axis."""
    n_views, f_p, h_p = w1_views.shape
    n_p = a_p.shape[0]
    g_p = p_p.shape[0]

    z_all, g_all = pl.pallas_call(
        fused_gcn_kernel,
        out_shape=(jax.ShapeDtypeStruct((n_views, n_p, h_p), jnp.float32),
                   jax.ShapeDtypeStruct((n_views, g_p, h_p), jnp.float32)),
        grid=(n_views,),
        in_specs=[
            pl.BlockSpec((n_p, n_p), lambda v: (0, 0)),           # A   (shared)
            pl.BlockSpec((n_p, f_p), lambda v: (0, 0)),           # X   (shared)
            pl.BlockSpec((None, f_p, h_p), lambda v: (v, 0, 0)),  # W1  (per view)
            pl.BlockSpec((1, h_p), lambda v: (0, 0)),             # b1  (shared)
            pl.BlockSpec((h_p, h_p), lambda v: (0, 0)),           # W2  (shared)
            pl.BlockSpec((1, h_p), lambda v: (0, 0)),             # b2  (shared)
            pl.BlockSpec((g_p, n_p), lambda v: (0, 0)),           # P   (shared)
        ],
        out_specs=(pl.BlockSpec((None, n_p, h_p), lambda v: (v, 0, 0)),
                   pl.BlockSpec((None, g_p, h_p), lambda v: (v, 0, 0))),
        compiler_params=pltpu.CompilerParams(
            dimension_semantics=("parallel",)),   # one view per TensorCore on v7x
    )(a_p, x_p, w1_views, b1_p, w2_p, b2_p, p_p)
    return z_all, g_all


# ---------------------------------------------------------------------------
# Plain-JAX glue: graph preprocessing, parameter init.
# ---------------------------------------------------------------------------
def normalized_adjacency(edge_index, num_nodes):
    """Dense GCN-normalized adjacency  D^{-1/2} (A + I) D^{-1/2}."""
    src, dst = edge_index
    adj = jnp.zeros((num_nodes, num_nodes), jnp.float32)
    adj = adj.at[src, dst].set(1.0)
    adj = adj.at[dst, src].set(1.0)                    # undirected
    adj = adj + jnp.eye(num_nodes, dtype=jnp.float32)  # self loops
    deg = jnp.sum(adj, axis=1)
    d_inv_sqrt = 1.0 / jnp.sqrt(jnp.maximum(deg, 1.0))
    return adj * d_inv_sqrt[:, None] * d_inv_sqrt[None, :]


def mean_pool_matrix(batch, num_graphs, num_nodes):
    """P[g, i] = 1/|graph g| if batch[i] == g else 0   (global mean pool)."""
    onehot = (batch[None, :] == jnp.arange(num_graphs)[:, None]).astype(jnp.float32)
    counts = jnp.maximum(jnp.sum(onehot, axis=1, keepdims=True), 1.0)
    return onehot / counts


def init_params(key, in_dim, hidden_dim):
    k1, k2 = jax.random.split(key)
    scale1 = 1.0 / jnp.sqrt(jnp.float32(in_dim))
    scale2 = 1.0 / jnp.sqrt(jnp.float32(hidden_dim))
    w1 = jax.random.normal(k1, (in_dim, hidden_dim), jnp.float32) * scale1
    b1 = jnp.zeros((1, hidden_dim), jnp.float32)
    w2 = jax.random.normal(k2, (hidden_dim, hidden_dim), jnp.float32) * scale2
    b2 = jnp.zeros((1, hidden_dim), jnp.float32)
    return w1, b1, w2, b2


# ---------------------------------------------------------------------------
# Encoder.forward equivalent
# ---------------------------------------------------------------------------
@functools.partial(jax.jit, static_argnames=("num_graphs",))
def encoder_forward(x, edge_index, batch, params, num_graphs):
    w1, b1, w2, b2 = params
    n, f = x.shape
    h = w1.shape[1]

    # augmentor = (aug1, aug2):
    #   aug1 = identity -> view 1 is bit-identical to the base view, so it is not
    #          recomputed; z1/g1 simply reuse z/g.
    #   aug2 = deterministic feature masking, edge_index unchanged -> the mask is
    #          folded into the layer-1 weights: (x*mask) @ W1 == x @ (mask[:,None]*W1).
    feat_mask = (jnp.arange(f) % 2 == 0).astype(jnp.float32)

    # Adjacency / pooling identical for every view -> built once, shared.
    a = normalized_adjacency(edge_index, n)
    pool = mean_pool_matrix(batch, num_graphs, n)

    # Pad to lane/sublane/MXU-friendly shapes.
    n_p = _round_up(n, LANE)            # N is the lane axis of A and P
    f_p = _round_up(f, LANE)
    h_p = _round_up(h, LANE)
    g_p = _round_up(num_graphs, SUBLANE)

    a_p = _pad_to(a, (n_p, n_p)).astype(jnp.bfloat16)
    x_p = _pad_to(x, (n_p, f_p)).astype(jnp.bfloat16)
    p_p = _pad_to(pool, (g_p, n_p)).astype(jnp.bfloat16)
    w1_views = jnp.stack([
        _pad_to(w1, (f_p, h_p)),                           # view 0: base / identity aug
        _pad_to(w1 * feat_mask[:, None], (f_p, h_p)),      # view 2: feature mask folded in
    ]).astype(jnp.bfloat16)                                # [2, F, H]
    w2_p = _pad_to(w2, (h_p, h_p)).astype(jnp.bfloat16)
    b1_p = _pad_to(b1, (1, h_p))                           # f32
    b2_p = _pad_to(b2, (1, h_p))                           # f32

    z_all, g_all = fused_gcn_views(a_p, x_p, w1_views, b1_p, w2_p, b2_p, p_p)

    z = z_all[0, :n, :h]
    z2 = z_all[1, :n, :h]
    g = g_all[0, :num_graphs, :h]
    g2 = g_all[1, :num_graphs, :h]
    # matches PyTorch return order (z, g, z1, z2, g1, g2); aug1 is identity so
    # z1 == z and g1 == g exactly.
    return z, g, z, z2, g, g2


if __name__ == "__main__":
    key = jax.random.PRNGKey(0)
    kx, kp = jax.random.split(key)

    # Small synthetic graph batch: 2 graphs x 8 nodes = 16 nodes, 32 features.
    num_nodes = 16
    num_graphs = 2
    nodes_per_graph = num_nodes // num_graphs
    in_dim = 32
    hidden_dim = 32

    x = jax.random.normal(kx, (num_nodes, in_dim), jnp.float32)

    # ring edges inside each graph of 8 nodes
    src, dst = [], []
    for gi in range(num_graphs):
        base = gi * nodes_per_graph
        for i in range(nodes_per_graph):
            src.append(base + i)
            dst.append(base + (i + 1) % nodes_per_graph)
    edge_index = jnp.array([src, dst], dtype=jnp.int32)                   # [2, E]
    batch = jnp.repeat(jnp.arange(num_graphs, dtype=jnp.int32),
                       nodes_per_graph)                                   # [N]

    params = init_params(kp, in_dim, hidden_dim)

    outs = encoder_forward(x, edge_index, batch, params, num_graphs)
    outs = jax.block_until_ready(outs)
    z, g, z1, z2, g1, g2 = outs

    # shape / finiteness checks
    assert z.shape == (num_nodes, hidden_dim) and g.shape == (num_graphs, hidden_dim)
    assert z1.shape == z.shape and z2.shape == z.shape
    assert g1.shape == g.shape and g2.shape == g.shape
    assert all(bool(jnp.all(jnp.isfinite(o))) for o in outs)
    # identity augmentation view must match the base view exactly
    assert bool(jnp.array_equal(z, z1)) and bool(jnp.array_equal(g, g1))

    # numerical check vs. a plain-JAX f32 reference (bf16 MXU inputs -> loose tol)
    w1, b1, w2, b2 = params
    a_ref = normalized_adjacency(edge_index, num_nodes)
    pool_ref = mean_pool_matrix(batch, num_graphs, num_nodes)
    mask = (jnp.arange(in_dim) % 2 == 0).astype(jnp.float32)

    def ref_gcn(xin):
        h1 = jnp.maximum(a_ref @ (xin @ w1) + b1, 0.0)
        zr = a_ref @ (h1 @ w2) + b2
        return zr, pool_ref @ zr

    z_r, g_r = ref_gcn(x)
    z2_r, g2_r = ref_gcn(x * mask[None, :])
    assert bool(jnp.allclose(z, z_r, rtol=1e-1, atol=1e-1))
    assert bool(jnp.allclose(g, g_r, rtol=1e-1, atol=1e-1))
    assert bool(jnp.allclose(z2, z2_r, rtol=1e-1, atol=1e-1))
    assert bool(jnp.allclose(g2, g2_r, rtol=1e-1, atol=1e-1))

    print("KERNEL_OK")
</pallas_src>

<mosaic_0001>
module attributes {stable_mosaic.version = 11 : i64} {
  func.func @fused_gcn_kernel(%arg0: i32, %arg1: memref<128x128xbf16, #tpu.memory_space<vmem>>, %arg2: memref<128x128xbf16, #tpu.memory_space<vmem>>, %arg3: memref<1x128x128xbf16, #tpu.memory_space<vmem>>, %arg4: memref<1x128xf32, #tpu.memory_space<vmem>>, %arg5: memref<128x128xbf16, #tpu.memory_space<vmem>>, %arg6: memref<1x128xf32, #tpu.memory_space<vmem>>, %arg7: memref<8x128xbf16, #tpu.memory_space<vmem>>, %arg8: memref<1x128x128xf32, #tpu.memory_space<vmem>>, %arg9: memref<1x8x128xf32, #tpu.memory_space<vmem>>) attributes {dimension_semantics = [#tpu.dimension_semantics<parallel>], iteration_bounds = array<i64: 2>, scalar_prefetch = 0 : i64, scratch_operands = 0 : i64, tpu.core_type = #tpu.core_type<tc>, window_params = [{pipeline_mode = #tpu.pipeline_mode<synchronous>, transform_indices = @transform_0, window_bounds = array<i64: 128, 128>}, {pipeline_mode = #tpu.pipeline_mode<synchronous>, transform_indices = @transform_1, window_bounds = array<i64: 128, 128>}, {transform_indices = @transform_2, window_bounds = array<i64: 1, 128, 128>}, {pipeline_mode = #tpu.pipeline_mode<synchronous>, transform_indices = @transform_3, window_bounds = array<i64: 1, 128>}, {pipeline_mode = #tpu.pipeline_mode<synchronous>, transform_indices = @transform_4, window_bounds = array<i64: 128, 128>}, {pipeline_mode = #tpu.pipeline_mode<synchronous>, transform_indices = @transform_5, window_bounds = array<i64: 1, 128>}, {pipeline_mode = #tpu.pipeline_mode<synchronous>, transform_indices = @transform_6, window_bounds = array<i64: 8, 128>}, {transform_indices = @transform_7, window_bounds = array<i64: 1, 128, 128>}, {transform_indices = @transform_8, window_bounds = array<i64: 1, 8, 128>}]} {
    %c0 = arith.constant 0 : index
    %c0_0 = arith.constant 0 : index
    %0 = vector.load %arg1[%c0, %c0_0] : memref<128x128xbf16, #tpu.memory_space<vmem>>, vector<128x128xbf16>
    %c0_1 = arith.constant 0 : index
    %c0_2 = arith.constant 0 : index
    %1 = vector.load %arg2[%c0_1, %c0_2] : memref<128x128xbf16, #tpu.memory_space<vmem>>, vector<128x128xbf16>
    %c0_3 = arith.constant 0 : index
    %c0_4 = arith.constant 0 : index
    %c0_5 = arith.constant 0 : index
    %2 = vector.load %arg3[%c0_3, %c0_4, %c0_5] : memref<1x128x128xbf16, #tpu.memory_space<vmem>>, vector<1x128x128xbf16>
    %3 = vector.shape_cast %2 : vector<1x128x128xbf16> to vector<128x128xbf16>
    %cst = arith.constant dense<0.000000e+00> : vector<128x128xf32>
    %4 = tpu.matmul %1, %3, %cst {dimension_numbers = #tpu.dot_dimension_numbers<[1], [0], [0], [1], [0, 0, 1, 1], [], []>} : vector<128x128xbf16>, vector<128x128xbf16>, vector<128x128xf32> -> vector<128x128xf32>
    %5 = arith.truncf %4 : vector<128x128xf32> to vector<128x128xbf16>
    %cst_6 = arith.constant dense<0.000000e+00> : vector<128x128xf32>
    %6 = tpu.matmul %0, %5, %cst_6 {dimension_numbers = #tpu.dot_dimension_numbers<[1], [0], [0], [1], [0, 0, 1, 1], [], []>} : vector<128x128xbf16>, vector<128x128xbf16>, vector<128x128xf32> -> vector<128x128xf32>
    %c0_7 = arith.constant 0 : index
    %c0_8 = arith.constant 0 : index
    %7 = vector.load %arg4[%c0_7, %c0_8] : memref<1x128xf32, #tpu.memory_space<vmem>>, vector<1x128xf32>
    %8 = vector.broadcast %7 : vector<1x128xf32> to vector<128x128xf32>
    %9 = arith.addf %6, %8 : vector<128x128xf32>
    %cst_9 = arith.constant 0.000000e+00 : f32
    %10 = vector.broadcast %cst_9 : f32 to vector<128x128xf32>
    %11 = arith.maximumf %9, %10 : vector<128x128xf32>
    %12 = arith.truncf %11 : vector<128x128xf32> to vector<128x128xbf16>
    %c0_10 = arith.constant 0 : index
    %c0_11 = arith.constant 0 : index
    %13 = vector.load %arg5[%c0_10, %c0_11] : memref<128x128xbf16, #tpu.memory_space<vmem>>, vector<128x128xbf16>
    %cst_12 = arith.constant dense<0.000000e+00> : vector<128x128xf32>
    %14 = tpu.matmul %12, %13, %cst_12 {dimension_numbers = #tpu.dot_dimension_numbers<[1], [0], [0], [1], [0, 0, 1, 1], [], []>} : vector<128x128xbf16>, vector<128x128xbf16>, vector<128x128xf32> -> vector<128x128xf32>
    %15 = arith.truncf %14 : vector<128x128xf32> to vector<128x128xbf16>
    %cst_13 = arith.constant dense<0.000000e+00> : vector<128x128xf32>
    %16 = tpu.matmul %0, %15, %cst_13 {dimension_numbers = #tpu.dot_dimension_numbers<[1], [0], [0], [1], [0, 0, 1, 1], [], []>} : vector<128x128xbf16>, vector<128x128xbf16>, vector<128x128xf32> -> vector<128x128xf32>
    %c0_14 = arith.constant 0 : index
    %c0_15 = arith.constant 0 : index
    %17 = vector.load %arg6[%c0_14, %c0_15] : memref<1x128xf32, #tpu.memory_space<vmem>>, vector<1x128xf32>
    %18 = vector.broadcast %17 : vector<1x128xf32> to vector<128x128xf32>
    %19 = arith.addf %16, %18 : vector<128x128xf32>
    %c0_16 = arith.constant 0 : index
    %c0_17 = arith.constant 0 : index
    %c0_18 = arith.constant 0 : index
    %20 = vector.load %arg8[%c0_16, %c0_17, %c0_18] : memref<1x128x128xf32, #tpu.memory_space<vmem>>, vector<1x128x128xf32>
    %21 = vector.shape_cast %20 : vector<1x128x128xf32> to vector<128x128xf32>
    %22 = vector.shape_cast %19 : vector<128x128xf32> to vector<1x128x128xf32>
    tpu.vector_store %arg8[%c0_16, %c0_17, %c0_18], %22 {strides = array<i32>} : memref<1x128x128xf32, #tpu.memory_space<vmem>>, vector<1x128x128xf32>,
    %c0_19 = arith.constant 0 : index
    %c0_20 = arith.constant 0 : index
    %23 = vector.load %arg7[%c0_19, %c0_20] : memref<8x128xbf16, #tpu.memory_space<vmem>>, vector<8x128xbf16>
    %24 = arith.truncf %19 : vector<128x128xf32> to vector<128x128xbf16>
    %cst_21 = arith.constant dense<0.000000e+00> : vector<8x128xf32>
    %25 = tpu.matmul %23, %24, %cst_21 {dimension_numbers = #tpu.dot_dimension_numbers<[1], [0], [0], [1], [0, 0, 1, 1], [], []>} : vector<8x128xbf16>, vector<128x128xbf16>, vector<8x128xf32> -> vector<8x128xf32>
    %c0_22 = arith.constant 0 : index
    %c0_23 = arith.constant 0 : index
    %c0_24 = arith.constant 0 : index
    %26 = vector.load %arg9[%c0_22, %c0_23, %c0_24] : memref<1x8x128xf32, #tpu.memory_space<vmem>>, vector<1x8x128xf32>
    %27 = vector.shape_cast %26 : vector<1x8x128xf32> to vector<8x128xf32>
    %28 = vector.shape_cast %25 : vector<8x128xf32> to vector<1x8x128xf32>
    tpu.vector_store %arg9[%c0_22, %c0_23, %c0_24], %28 {strides = array<i32>} : memref<1x8x128xf32, #tpu.memory_space<vmem>>, vector<1x8x128xf32>,
    return
  }
  func.func @transform_0(%arg0: i32) -> (i32, i32) {
    %c0_i32 = arith.constant 0 : i32
    %c0_i32_0 = arith.constant 0 : i32
    %c0_i32_1 = arith.constant 0 : i32
    return %c0_i32, %c0_i32_0 : i32, i32
  }
  func.func @transform_1(%arg0: i32) -> (i32, i32) {
    %c0_i32 = arith.constant 0 : i32
    %c0_i32_0 = arith.constant 0 : i32
    %c0_i32_1 = arith.constant 0 : i32
    return %c0_i32, %c0_i32_0 : i32, i32
  }
  func.func @transform_2(%arg0: i32) -> (i32, i32, i32) {
    %c0_i32 = arith.constant 0 : i32
    %c0_i32_0 = arith.constant 0 : i32
    %c0_i32_1 = arith.constant 0 : i32
    return %arg0, %c0_i32, %c0_i32_0 : i32, i32, i32
  }
  func.func @transform_3(%arg0: i32) -> (i32, i32) {
    %c0_i32 = arith.constant 0 : i32
    %c0_i32_0 = arith.constant 0 : i32
    %c0_i32_1 = arith.constant 0 : i32
    return %c0_i32, %c0_i32_0 : i32, i32
  }
  func.func @transform_4(%arg0: i32) -> (i32, i32) {
    %c0_i32 = arith.constant 0 : i32
    %c0_i32_0 = arith.constant 0 : i32
    %c0_i32_1 = arith.constant 0 : i32
    return %c0_i32, %c0_i32_0 : i32, i32
  }
  func.func @transform_5(%arg0: i32) -> (i32, i32) {
    %c0_i32 = arith.constant 0 : i32
    %c0_i32_0 = arith.constant 0 : i32
    %c0_i32_1 = arith.constant 0 : i32
    return %c0_i32, %c0_i32_0 : i32, i32
  }
  func.func @transform_6(%arg0: i32) -> (i32, i32) {
    %c0_i32 = arith.constant 0 : i32
    %c0_i32_0 = arith.constant 0 : i32
    %c0_i32_1 = arith.constant 0 : i32
    return %c0_i32, %c0_i32_0 : i32, i32
  }
  func.func @transform_7(%arg0: i32) -> (i32, i32, i32) {
    %c0_i32 = arith.constant 0 : i32
    %c0_i32_0 = arith.constant 0 : i32
    %c0_i32_1 = arith.constant 0 : i32
    return %arg0, %c0_i32, %c0_i32_0 : i32, i32, i32
  }
  func.func @transform_8(%arg0: i32) -> (i32, i32, i32) {
    %c0_i32 = arith.constant 0 : i32
    %c0_i32_0 = arith.constant 0 : i32
    %c0_i32_1 = arith.constant 0 : i32
    return %arg0, %c0_i32, %c0_i32_0 : i32, i32, i32
  }
}

</mosaic_0001>

<llo_original>
// kernel: encoder_forward.1
$region0: #{encoder_forward.1}
  #allocation0 [shape = 'u32[]', space=smem, size = 0x4, offset = 0x4, fixed_abs, tag = 'smem constant byte address 0x4 - core index']
  #allocation1 [shape = 'u32[144,128]{1,0:T(1,128)}', space=vmem, size = 0x12000, scoped, tag = 'internal scratch']
  %s0 = inlined_call_operand.vmem [shape: bf16[128,128], index: 0, kind: input, shape index: {}]
  %s1 = inlined_call_operand.vmem [shape: bf16[128,128], index: 1, kind: input, shape index: {}]
  %s2 = inlined_call_operand.vmem [shape: bf16[2,128,128], index: 2, kind: input, shape index: {}]
  %s3 = inlined_call_operand.vmem [shape: f32[1,128], index: 3, kind: input, shape index: {}]
  %s4 = inlined_call_operand.vmem [shape: bf16[128,128], index: 4, kind: input, shape index: {}]
  %s5 = inlined_call_operand.vmem [shape: f32[1,128], index: 5, kind: input, shape index: {}]
  %s6 = inlined_call_operand.vmem [shape: bf16[8,128], index: 6, kind: input, shape index: {}]
  %s7 = inlined_call_operand.vmem [shape: f32[2,128,128], index: 7, kind: output, shape index: {0}]
  %s8 = inlined_call_operand.vmem [shape: f32[2,8,128], index: 8, kind: output, shape index: {1}]
  %9 = xla_tuple %s7, %s8
  %s10 = sld [smem:[#allocation0]]
  $region69: #{encoder_forward.1} parent=0
    _
  %s12 = ssub.s32 1, %s10
  %s13 = scalar_select 0, %s12, %s10
  loop: start=0, step=1, limit=4
  $region2: #{encoder_forward.1} parent=0 // loop_pre_header
    _
  $region3: #{encoder_forward.1} parent=0 // loop_header
    %s15 = sphi 0, %s19
    %p16 = scmp.ge.s32.totalorder %s15, 4
    %s23 = sphi 0, %s23
    %s25 = sphi 0, %s23
    %s26 = sphi 0, %s25
    %s40 = sphi 0, %s26
    %s44 = sphi 0, %s44
    %s46 = sphi 0, %s44
    %s47 = sphi 0, %s46
    %s61 = sphi 0, %s47
    %s67 = sphi 0, %s69
    %s70 = sphi 0, %s67
    %s71 = sphi 0, %s70
    %s87 = sphi 0, %s71
    %s91 = sphi 0, %s91
    %s93 = sphi 0, %s91
    %s94 = sphi 0, %s93
    %s108 = sphi 0, %s94
    %s112 = sphi 0, %s112
    %s114 = sphi 0, %s112
    %s115 = sphi 0, %s114
    %s129 = sphi 0, %s115
    %s133 = sphi 0, %s133
    %s135 = sphi 0, %s133
    %s136 = sphi 0, %s135
    %s150 = sphi 0, %s136
    %s154 = sphi 0, %s154
    %s156 = sphi 0, %s154
    %s157 = sphi 0, %s156
    %s171 = sphi 0, %s157
    %s177 = sphi 0, %s179
    %s180 = sphi 0, %s177
    %s181 = sphi 0, %s180
    %s197 = sphi 0, %s181
    %s203 = sphi 0, %s205
    %s206 = sphi 0, %s203
    %s207 = sphi 0, %s206
    %s223 = sphi 0, %s207
  $region4: #{encoder_forward.1} parent=0 // loop_header_branch
    %18 = sbr.rel (%p16) target = $region8
  $region5: #{encoder_forward.1} parent=0 // loop_body
    %s20 = ssub.s32 %s15, 1
    %s21 = ssub.s32 %s15, 2
    %s22 = sadd.s32 %s15, 1
    %s24 = sadd.s32 %s23, 1
    %p27 = scmp.eq.s32.totalorder %s15, 1
    %p28 = scmp.ne.s32.totalorder %s23, %s25
    %p29 = scmp.eq.s32.totalorder %s15, 0
    %p30 = por %p28, %p29
    %p31 = scmp.ne.s32.totalorder %s23, %s25
    %p32 = scmp.eq.s32.totalorder %s20, 1
    %p33 = por %p31, %p32
    %p34 = scmp.ne.s32.totalorder %s25, %s26
    %p35 = scmp.eq.s32.totalorder %s20, 0
    %p36 = por %p34, %p35
    %p37 = scmp.ne.s32.totalorder %s25, %s26
    %p38 = scmp.eq.s32.totalorder %s21, 1
    %p39 = por %p37, %p38
    %p41 = scmp.ne.s32.totalorder %s26, %s40
    %p42 = scmp.eq.s32.totalorder %s21, 0
    %p43 = por %p41, %p42
    %s45 = sadd.s32 %s44, 1
    %p48 = scmp.eq.s32.totalorder %s15, 1
    %p49 = scmp.ne.s32.totalorder %s44, %s46
    %p50 = scmp.eq.s32.totalorder %s15, 0
    %p51 = por %p49, %p50
    %p52 = scmp.ne.s32.totalorder %s44, %s46
    %p53 = scmp.eq.s32.totalorder %s20, 1
    %p54 = por %p52, %p53
    %p55 = scmp.ne.s32.totalorder %s46, %s47
    %p56 = scmp.eq.s32.totalorder %s20, 0
    %p57 = por %p55, %p56
    %p58 = scmp.ne.s32.totalorder %s46, %s47
    %p59 = scmp.eq.s32.totalorder %s21, 1
    %p60 = por %p58, %p59
    %p62 = scmp.ne.s32.totalorder %s47, %s61
    %p63 = scmp.eq.s32.totalorder %s21, 0
    %p64 = por %p62, %p63
    %s65 = ssub.s32 %s15, %s22
    %p66 = scmp.eq.s32.totalorder %s65, 0
    %s68 = sadd.s32 %s67, 1
    %s69 = scalar_select %p66, %s67, %s68
    %p72 = pneg %p66
    %p73 = scmp.eq.s32.totalorder %s15, 1
    %p74 = por %p72, %p73
    %p75 = scmp.ne.s32.totalorder %s67, %s70
    %p76 = scmp.eq.s32.totalorder %s15, 0
    %p77 = por %p75, %p76
    %p78 = scmp.ne.s32.totalorder %s67, %s70
    %p79 = scmp.eq.s32.totalorder %s20, 1
    %p80 = por %p78, %p79
    %p81 = scmp.ne.s32.totalorder %s70, %s71
    %p82 = scmp.eq.s32.totalorder %s20, 0
    %p83 = por %p81, %p82
    %p84 = scmp.ne.s32.totalorder %s70, %s71
    %p85 = scmp.eq.s32.totalorder %s21, 1
    %p86 = por %p84, %p85
    %p88 = scmp.ne.s32.totalorder %s71, %s87
    %p89 = scmp.eq.s32.totalorder %s21, 0
    %p90 = por %p88, %p89
    %s92 = sadd.s32 %s91, 1
    %p95 = scmp.eq.s32.totalorder %s15, 1
    %p96 = scmp.ne.s32.totalorder %s91, %s93
    %p97 = scmp.eq.s32.totalorder %s15, 0
    %p98 = por %p96, %p97
    %p99 = scmp.ne.s32.totalorder %s91, %s93
    %p100 = scmp.eq.s32.totalorder %s20, 1
    %p101 = por %p99, %p100
    %p102 = scmp.ne.s32.totalorder %s93, %s94
    %p103 = scmp.eq.s32.totalorder %s20, 0
    %p104 = por %p102, %p103
    %p105 = scmp.ne.s32.totalorder %s93, %s94
    %p106 = scmp.eq.s32.totalorder %s21, 1
    %p107 = por %p105, %p106
    %p109 = scmp.ne.s32.totalorder %s94, %s108
    %p110 = scmp.eq.s32.totalorder %s21, 0
    %p111 = por %p109, %p110
    %s113 = sadd.s32 %s112, 1
    %p116 = scmp.eq.s32.totalorder %s15, 1
    %p117 = scmp.ne.s32.totalorder %s112, %s114
    %p118 = scmp.eq.s32.totalorder %s15, 0
    %p119 = por %p117, %p118
    %p120 = scmp.ne.s32.totalorder %s112, %s114
    %p121 = scmp.eq.s32.totalorder %s20, 1
    %p122 = por %p120, %p121
    %p123 = scmp.ne.s32.totalorder %s114, %s115
    %p124 = scmp.eq.s32.totalorder %s20, 0
    %p125 = por %p123, %p124
    %p126 = scmp.ne.s32.totalorder %s114, %s115
    %p127 = scmp.eq.s32.totalorder %s21, 1
    %p128 = por %p126, %p127
    %p130 = scmp.ne.s32.totalorder %s115, %s129
    %p131 = scmp.eq.s32.totalorder %s21, 0
    %p132 = por %p130, %p131
    %s134 = sadd.s32 %s133, 1
    %p137 = scmp.eq.s32.totalorder %s15, 1
    %p138 = scmp.ne.s32.totalorder %s133, %s135
    %p139 = scmp.eq.s32.totalorder %s15, 0
    %p140 = por %p138, %p139
    %p141 = scmp.ne.s32.totalorder %s133, %s135
    %p142 = scmp.eq.s32.totalorder %s20, 1
    %p143 = por %p141, %p142
    %p144 = scmp.ne.s32.totalorder %s135, %s136
    %p145 = scmp.eq.s32.totalorder %s20, 0
    %p146 = por %p144, %p145
    %p147 = scmp.ne.s32.totalorder %s135, %s136
    %p148 = scmp.eq.s32.totalorder %s21, 1
    %p149 = por %p147, %p148
    %p151 = scmp.ne.s32.totalorder %s136, %s150
    %p152 = scmp.eq.s32.totalorder %s21, 0
    %p153 = por %p151, %p152
    %s155 = sadd.s32 %s154, 1
    %p158 = scmp.eq.s32.totalorder %s15, 1
    %p159 = scmp.ne.s32.totalorder %s154, %s156
    %p160 = scmp.eq.s32.totalorder %s15, 0
    %p161 = por %p159, %p160
    %p162 = scmp.ne.s32.totalorder %s154, %s156
    %p163 = scmp.eq.s32.totalorder %s20, 1
    %p164 = por %p162, %p163
    %p165 = scmp.ne.s32.totalorder %s156, %s157
    %p166 = scmp.eq.s32.totalorder %s20, 0
    %p167 = por %p165, %p166
    %p168 = scmp.ne.s32.totalorder %s156, %s157
    %p169 = scmp.eq.s32.totalorder %s21, 1
    %p170 = por %p168, %p169
    %p172 = scmp.ne.s32.totalorder %s157, %s171
    %p173 = scmp.eq.s32.totalorder %s21, 0
    %p174 = por %p172, %p173
    %s175 = ssub.s32 %s15, %s22
    %p176 = scmp.eq.s32.totalorder %s175, 0
    %s178 = sadd.s32 %s177, 1
    %s179 = scalar_select %p176, %s177, %s178
    %p182 = pneg %p176
    %p183 = scmp.eq.s32.totalorder %s15, 1
    %p184 = por %p182, %p183
    %p185 = scmp.ne.s32.totalorder %s177, %s180
    %p186 = scmp.eq.s32.totalorder %s15, 0
    %p187 = por %p185, %p186
    %p188 = scmp.ne.s32.totalorder %s177, %s180
    %p189 = scmp.eq.s32.totalorder %s20, 1
    %p190 = por %p188, %p189
    %p191 = scmp.ne.s32.totalorder %s180, %s181
    %p192 = scmp.eq.s32.totalorder %s20, 0
    %p193 = por %p191, %p192
    %p194 = scmp.ne.s32.totalorder %s180, %s181
    %p195 = scmp.eq.s32.totalorder %s21, 1
    %p196 = por %p194, %p195
    %p198 = scmp.ne.s32.totalorder %s181, %s197
    %p199 = scmp.eq.s32.totalorder %s21, 0
    %p200 = por %p198, %p199
    %s201 = ssub.s32 %s15, %s22
    %p202 = scmp.eq.s32.totalorder %s201, 0
    %s204 = sadd.s32 %s203, 1
    %s205 = scalar_select %p202, %s203, %s204
    %p208 = pneg %p202
    %p209 = scmp.eq.s32.totalorder %s15, 1
    %p210 = por %p208, %p209
    %p211 = scmp.ne.s32.totalorder %s203, %s206
    %p212 = scmp.eq.s32.totalorder %s15, 0
    %p213 = por %p211, %p212
    %p214 = scmp.ne.s32.totalorder %s203, %s206
    %p215 = scmp.eq.s32.totalorder %s20, 1
    %p216 = por %p214, %p215
    %p217 = scmp.ne.s32.totalorder %s206, %s207
    %p218 = scmp.eq.s32.totalorder %s20, 0
    %p219 = por %p217, %p218
    %p220 = scmp.ne.s32.totalorder %s206, %s207
    %p221 = scmp.eq.s32.totalorder %s21, 1
    %p222 = por %p220, %p221
    %p224 = scmp.ne.s32.totalorder %s207, %s223
    %p225 = scmp.eq.s32.totalorder %s21, 0
    %p226 = por %p224, %p225
    %p227 = scmp.le.s32.totalorder 1, %s15
    %p228 = scmp.lt.s32.totalorder %s15, 3
    %p229 = pnand %p227, %p228
    %p230 = pneg %p229
    // Predicated region
    $region9: #{encoder_forward.1} parent=5 // pred_check
      _
    $region10: #{encoder_forward.1} parent=5 // pred_check_branch
      %232 = sbr.rel (%p229) target = $region12
    $region11: #{encoder_forward.1} parent=5 // pred_region
      %s233 = ssub.s32 %s15, 1
      // Predicated region
      $region13: #{encoder_forward.1} parent=11 // pred_check
        %p234 = pneg %p36
      $region14: #{encoder_forward.1} parent=11 // pred_check_branch
        %236 = sbr.rel (%p234) target = $region16
      $region15: #{encoder_forward.1} parent=11 // pred_region
        _
      $region16: #{encoder_forward.1} parent=11 // pred_fallthru
        _
      // Predicated region
      $region17: #{encoder_forward.1} parent=11 // pred_check
        %p237 = pneg %p57
      $region18: #{encoder_forward.1} parent=11 // pred_check_branch
        %239 = sbr.rel (%p237) target = $region20
      $region19: #{encoder_forward.1} parent=11 // pred_region
        _
      $region20: #{encoder_forward.1} parent=11 // pred_fallthru
        _
      // Predicated region
      $region21: #{encoder_forward.1} parent=11 // pred_check
        %p240 = pneg %p104
      $region22: #{encoder_forward.1} parent=11 // pred_check_branch
        %242 = sbr.rel (%p240) target = $region24
      $region23: #{encoder_forward.1} parent=11 // pred_region
        _
      $region24: #{encoder_forward.1} parent=11 // pred_fallthru
        _
      // Predicated region
      $region25: #{encoder_forward.1} parent=11 // pred_check
        %p243 = pneg %p125
      $region26: #{encoder_forward.1} parent=11 // pred_check_branch
        %245 = sbr.rel (%p243) target = $region28
      $region27: #{encoder_forward.1} parent=11 // pred_region
        _
      $region28: #{encoder_forward.1} parent=11 // pred_fallthru
        _
      // Predicated region
      $region29: #{encoder_forward.1} parent=11 // pred_check
        %p246 = pneg %p146
      $region30: #{encoder_forward.1} parent=11 // pred_check_branch
        %248 = sbr.rel (%p246) target = $region32
      $region31: #{encoder_forward.1} parent=11 // pred_region
        _
      $region32: #{encoder_forward.1} parent=11 // pred_fallthru
        _
      // Predicated region
      $region33: #{encoder_forward.1} parent=11 // pred_check
        %p249 = pneg %p167
      $region34: #{encoder_forward.1} parent=11 // pred_check_branch
        %251 = sbr.rel (%p249) target = $region36
      $region35: #{encoder_forward.1} parent=11 // pred_region
        _
      $region36: #{encoder_forward.1} parent=11 // pred_fallthru
        _
    $region12: #{encoder_forward.1} parent=5 // pred_fallthru
      _
    %p252 = scmp.lt.s32.totalorder %s15, 2
    // Predicated region
    $region37: #{encoder_forward.1} parent=5 // pred_check
      %p253 = pneg %p252
    $region38: #{encoder_forward.1} parent=5 // pred_check_branch
      %255 = sbr.rel (%p253) target = $region40
    $region39: #{encoder_forward.1} parent=5 // pred_region
      // Predicated region
      $region41: #{encoder_forward.1} parent=39 // pred_check
        %p256 = pneg %p77
      $region42: #{encoder_forward.1} parent=39 // pred_check_branch
        %258 = sbr.rel (%p256) target = $region44
      $region43: #{encoder_forward.1} parent=39 // pred_region
        %p259 = scmp.lt.s32.totalorder %s15, 1
        %s260 = scalar_select %p259, %s15, 1
        %s261 = smul.addr %s260, 16
        %s262 = smul.addr %s261, 4
        %s263 = scalar_lea.vmem %s2, %s262
      $region44: #{encoder_forward.1} parent=39 // pred_fallthru
        _
    $region40: #{encoder_forward.1} parent=5 // pred_fallthru
      _
    %p264 = scmp.le.s32.totalorder 1, %s15
    %p265 = scmp.lt.s32.totalorder %s15, 3
    %p266 = pnand %p264, %p265
    %p267 = pneg %p266
    // Predicated region
    $region45: #{encoder_forward.1} parent=5 // pred_check
      _
    $region46: #{encoder_forward.1} parent=5 // pred_check_branch
      %269 = sbr.rel (%p266) target = $region48
    $region47: #{encoder_forward.1} parent=5 // pred_region
      %s270 = ssub.s32 %s15, 1
      %p271 = pneg %p36
      %p272 = pneg %p33
      %p273 = pneg %p57
      %p274 = pneg %p54
      %p275 = scmp.lt.s32.totalorder %s20, 1
      %s276 = scalar_select %p275, %s20, 1
      %s277 = smul.addr %s276, 16
      %s278 = smul.addr %s277, 4
      %s279 = scalar_lea.vmem %s2, %s278
      %p280 = pneg %p83
      %p281 = pneg %p80
      %p282 = pneg %p104
      %p283 = pneg %p101
      %p284 = pneg %p125
      %p285 = pneg %p122
      %p286 = pneg %p146
      %p287 = pneg %p143
      %p288 = pneg %p167
      %p289 = pneg %p164
      %p290 = pneg %p193
      %p291 = pneg %p190
      %p292 = scmp.lt.s32.totalorder %s20, 1
      %s293 = scalar_select %p292, %s20, 1
      %s294 = smul.addr %s293, 16
      %s295 = smul.addr %s294, 8
      %s296 = scalar_lea.vmem %s7, %s295
      %p297 = pneg %p219
      %p298 = pneg %p216
      %p299 = scmp.lt.s32.totalorder %s20, 1
      %s300 = scalar_select %p299, %s20, 1
      %s301 = smul.addr %s300, 8
      %s302 = scalar_lea.vmem %s8, %s301
      %p303 = scmp.lt.s32.totalorder %s20, 1
      %s304 = scalar_select %p303, %s20, 1
      %s305 = smul.addr %s304, 16
      %s306 = smul.addr %s305, 4
      %s307 = scalar_lea.vmem %s2, %s306
      %p308 = scmp.lt.s32.totalorder %s20, 1
      %s309 = scalar_select %p308, %s20, 1
      %s310 = smul.addr %s309, 16
      %s311 = smul.addr %s310, 8
      %s312 = scalar_lea.vmem %s7, %s311
      %p313 = scmp.lt.s32.totalorder %s20, 1
      %s314 = scalar_select %p313, %s20, 1
      %s315 = smul.addr %s314, 8
      %s316 = scalar_lea.vmem %s8, %s315
      %v318 = vld [vmem:[%s0] sm:$0xf]
      %v319 = vld [vmem:[%s0 + $0x4] sm:$0xf]
      %v320 = vld [vmem:[%s0 + $0x8] sm:$0xf]
      %v321 = vld [vmem:[%s0 + $0xc] sm:$0xf]
      %v322 = vld [vmem:[%s0 + $0x10] sm:$0xf]
      %v323 = vld [vmem:[%s0 + $0x14] sm:$0xf]
      %v324 = vld [vmem:[%s0 + $0x18] sm:$0xf]
      %v325 = vld [vmem:[%s0 + $0x1c] sm:$0xf]
      %v326 = vld [vmem:[%s0 + $0x20] sm:$0xf]
      %v327 = vld [vmem:[%s0 + $0x24] sm:$0xf]
      %v328 = vld [vmem:[%s0 + $0x28] sm:$0xf]
      %v329 = vld [vmem:[%s0 + $0x2c] sm:$0xf]
      %v330 = vld [vmem:[%s0 + $0x30] sm:$0xf]
      %v331 = vld [vmem:[%s0 + $0x34] sm:$0xf]
      %v332 = vld [vmem:[%s0 + $0x38] sm:$0xf]
      %v333 = vld [vmem:[%s0 + $0x3c] sm:$0xf]
      %v334 = vld [vmem:[%s1] sm:$0xf]
      %v335 = vld [vmem:[%s1 + $0x4] sm:$0xf]
      %v336 = vld [vmem:[%s1 + $0x8] sm:$0xf]
      %v337 = vld [vmem:[%s1 + $0xc] sm:$0xf]
      %v338 = vld [vmem:[%s1 + $0x10] sm:$0xf]
      %v339 = vld [vmem:[%s1 + $0x14] sm:$0xf]
      %v340 = vld [vmem:[%s1 + $0x18] sm:$0xf]
      %v341 = vld [vmem:[%s1 + $0x1c] sm:$0xf]
      %v342 = vld [vmem:[%s1 + $0x20] sm:$0xf]
      %v343 = vld [vmem:[%s1 + $0x24] sm:$0xf]
      %v344 = vld [vmem:[%s1 + $0x28] sm:$0xf]
      %v345 = vld [vmem:[%s1 + $0x2c] sm:$0xf]
      %v346 = vld [vmem:[%s1 + $0x30] sm:$0xf]
      %v347 = vld [vmem:[%s1 + $0x34] sm:$0xf]
      %v348 = vld [vmem:[%s1 + $0x38] sm:$0xf]
      %v349 = vld [vmem:[%s1 + $0x3c] sm:$0xf]
      %v350 = vld [vmem:[%s307] sm:$0xf]
      %v351 = vld [vmem:[%s307 + $0x4] sm:$0xf]
      %v352 = vld [vmem:[%s307 + $0x8] sm:$0xf]
      %v353 = vld [vmem:[%s307 + $0xc] sm:$0xf]
      %v354 = vld [vmem:[%s307 + $0x10] sm:$0xf]
      %v355 = vld [vmem:[%s307 + $0x14] sm:$0xf]
      %v356 = vld [vmem:[%s307 + $0x18] sm:$0xf]
      %v357 = vld [vmem:[%s307 + $0x1c] sm:$0xf]
      %v358 = vld [vmem:[%s307 + $0x20] sm:$0xf]
      %v359 = vld [vmem:[%s307 + $0x24] sm:$0xf]
      %v360 = vld [vmem:[%s307 + $0x28] sm:$0xf]
      %v361 = vld [vmem:[%s307 + $0x2c] sm:$0xf]
      %v362 = vld [vmem:[%s307 + $0x30] sm:$0xf]
      %v363 = vld [vmem:[%s307 + $0x34] sm:$0xf]
      %v364 = vld [vmem:[%s307 + $0x38] sm:$0xf]
      %v365 = vld [vmem:[%s307 + $0x3c] sm:$0xf]
      %v382 = vunpack.c.l.b16 %v334
      %v383 = vunpack.c.l.b16 %v335
      %v384 = vunpack.c.l.b16 %v336
      %v385 = vunpack.c.l.b16 %v337
      %v386 = vunpack.c.l.b16 %v338
      %v387 = vunpack.c.l.b16 %v339
      %v388 = vunpack.c.l.b16 %v340
      %v389 = vunpack.c.l.b16 %v341
      %v390 = vunpack.c.l.b16 %v342
      %v391 = vunpack.c.l.b16 %v343
      %v392 = vunpack.c.l.b16 %v344
      %v393 = vunpack.c.l.b16 %v345
      %v394 = vunpack.c.l.b16 %v346
      %v395 = vunpack.c.l.b16 %v347
      %v396 = vunpack.c.l.b16 %v348
      %v397 = vunpack.c.l.b16 %v349
      %v398 = vpack.c.b16 %v383, %v382
      %v399 = vpack.c.b16 %v385, %v384
      %v400 = vpack.c.b16 %v387, %v386
      %v401 = vpack.c.b16 %v389, %v388
      %v402 = vpack.c.b16 %v391, %v390
      %v403 = vpack.c.b16 %v393, %v392
      %v404 = vpack.c.b16 %v395, %v394
      %v405 = vpack.c.b16 %v397, %v396
      %v430 = vunpack.c.l.b16 %v350
      %v431 = vunpack.c.l.b16 %v351
      %v432 = vunpack.c.l.b16 %v352
      %v433 = vunpack.c.l.b16 %v353
      %v434 = vunpack.c.l.b16 %v354
      %v435 = vunpack.c.l.b16 %v355
      %v436 = vunpack.c.l.b16 %v356
      %v437 = vunpack.c.l.b16 %v357
      %v438 = vunpack.c.l.b16 %v358
      %v439 = vunpack.c.l.b16 %v359
      %v440 = vunpack.c.l.b16 %v360
      %v441 = vunpack.c.l.b16 %v361
      %v442 = vunpack.c.l.b16 %v362
      %v443 = vunpack.c.l.b16 %v363
      %v444 = vunpack.c.l.b16 %v364
      %v445 = vunpack.c.l.b16 %v365
      %v446 = vpack.c.b16 %v431, %v430
      %v447 = vpack.c.b16 %v433, %v432
      %v448 = vpack.c.b16 %v435, %v434
      %v449 = vpack.c.b16 %v437, %v436
      %v450 = vpack.c.b16 %v439, %v438
      %v451 = vpack.c.b16 %v441, %v440
      %v452 = vpack.c.b16 %v443, %v442
      %v453 = vpack.c.b16 %v445, %v444
      %462 = vmatprep.subr.bf16.mxu0 0
      %463 = vmatpush1.bf16.msra.mxu0 %v453
      %464 = vmatprep.subr.bf16.mxu0 0
      %465 = vmatpush1.bf16.msra.mxu0 %v452
      %466 = vmatprep.subr.bf16.mxu0 0
      %467 = vmatpush1.bf16.msra.mxu0 %v451
      %468 = vmatprep.subr.bf16.mxu0 0
      %469 = vmatpush1.bf16.msra.mxu0 %v450
      %470 = vmatprep.subr.bf16.mxu0 0
      %471 = vmatpush1.bf16.msra.mxu0 %v449
      %472 = vmatprep.subr.bf16.mxu0 0
      %473 = vmatpush1.bf16.msra.mxu0 %v448
      %474 = vmatprep.subr.bf16.mxu0 0
      %475 = vmatpush1.bf16.msra.mxu0 %v447
      %476 = vmatprep.subr.bf16.mxu0 0
      %477 = vmatpush1.bf16.msra.mxu0 %v446
      %478 = vmatprep.subr.bf16.mxu0 0
      %479 = vmatpush2.bf16.msra.mxu0 0
      %480 = vmatprep.subr.bf16.mxu0 0
      %481 = vmatpush2.bf16.msra.mxu0 0
      %482 = vmatprep.subr.bf16.mxu0 0
      %483 = vmatpush2.bf16.msra.mxu0 0
      %484 = vmatprep.subr.bf16.mxu0 0
      %485 = vmatpush2.bf16.msra.mxu0 0
      %486 = vmatprep.subr.bf16.mxu0 0
      %487 = vmatpush2.bf16.msra.mxu0 0
      %488 = vmatprep.subr.bf16.mxu0 0
      %489 = vmatpush2.bf16.msra.mxu0 0
      %490 = vmatprep.subr.bf16.mxu0 0
      %491 = vmatpush2.bf16.msra.mxu0 0
      %492 = vmatprep.subr.bf16.mxu0 0
      %493 = vmatpush2.bf16.msra.mxu0 0
      %494 = vmatprep.mubr.bf16.mxu0 0
      %495 = vmatmul.mubr.bf16.gmra.mxu0 %v398
      %v496 = vpop.f32.mrf.mxu0
      %v497 = vadd.f32 0.0, %v496
      %v498 = vpop.f32.mrf.mxu0
      %v499 = vpop.f32.mrf.mxu0
      %v500 = vadd.f32 0.0, %v499
      %v501 = vpop.f32.mrf.mxu0
      %502 = vmatprep.mubr.bf16.mxu0 0
      %503 = vmatmul.mubr.bf16.gmra.mxu0 %v399
      %v504 = vpop.f32.mrf.mxu0
      %v505 = vadd.f32 0.0, %v504
      %v506 = vpop.f32.mrf.mxu0
      %v507 = vpop.f32.mrf.mxu0
      %v508 = vadd.f32 0.0, %v507
      %v509 = vpop.f32.mrf.mxu0
      %510 = vmatprep.mubr.bf16.mxu0 0
      %511 = vmatmul.mubr.bf16.gmra.mxu0 %v400
      %v512 = vpop.f32.mrf.mxu0
      %v513 = vadd.f32 0.0, %v512
      %v514 = vpop.f32.mrf.mxu0
      %v515 = vpop.f32.mrf.mxu0
      %v516 = vadd.f32 0.0, %v515
      %v517 = vpop.f32.mrf.mxu0
      %518 = vmatprep.mubr.bf16.mxu0 0
      %519 = vmatmul.mubr.bf16.gmra.mxu0 %v401
      %v520 = vpop.f32.mrf.mxu0
      %v521 = vadd.f32 0.0, %v520
      %v522 = vpop.f32.mrf.mxu0
      %v523 = vpop.f32.mrf.mxu0
      %v524 = vadd.f32 0.0, %v523
      %v525 = vpop.f32.mrf.mxu0
      %526 = vmatprep.mubr.bf16.mxu0 0
      %527 = vmatmul.mubr.bf16.gmra.mxu0 %v402
      %v528 = vpop.f32.mrf.mxu0
      %v529 = vadd.f32 0.0, %v528
      %v530 = vpop.f32.mrf.mxu0
      %v531 = vpop.f32.mrf.mxu0
      %v532 = vadd.f32 0.0, %v531
      %v533 = vpop.f32.mrf.mxu0
      %534 = vmatprep.mubr.bf16.mxu0 0
      %535 = vmatmul.mubr.bf16.gmra.mxu0 %v403
      %v536 = vpop.f32.mrf.mxu0
      %v537 = vadd.f32 0.0, %v536
      %v538 = vpop.f32.mrf.mxu0
      %v539 = vpop.f32.mrf.mxu0
      %v540 = vadd.f32 0.0, %v539
      %v541 = vpop.f32.mrf.mxu0
      %542 = vmatprep.mubr.bf16.mxu0 0
      %543 = vmatmul.mubr.bf16.gmra.mxu0 %v404
      %v544 = vpop.f32.mrf.mxu0
      %v545 = vadd.f32 0.0, %v544
      %v546 = vpop.f32.mrf.mxu0
      %v547 = vpop.f32.mrf.mxu0
      %v548 = vadd.f32 0.0, %v547
      %v549 = vpop.f32.mrf.mxu0
      %550 = vmatprep.mubr.bf16.mxu0 0
      %551 = vmatmul.mubr.bf16.gmra.mxu0 %v405
      %v552 = vpop.f32.mrf.mxu0
      %v553 = vadd.f32 0.0, %v552
      %v554 = vpop.f32.mrf.mxu0
      %v555 = vpop.f32.mrf.mxu0
      %v556 = vadd.f32 0.0, %v555
      %v557 = vpop.f32.mrf.mxu0
      %558 = vdwg.mxu0
      %v559 = vpack.c.bf16 %v500, %v497
      %v560 = vpack.c.bf16 %v508, %v505
      %v561 = vpack.c.bf16 %v516, %v513
      %v562 = vpack.c.bf16 %v524, %v521
      %v563 = vpack.c.bf16 %v532, %v529
      %v564 = vpack.c.bf16 %v540, %v537
      %v565 = vpack.c.bf16 %v548, %v545
      %v566 = vpack.c.bf16 %v556, %v553
      %v567 = vld [vmem:[%s3] sm:$0x1]
      %v569 = vlaneseq
      %v570 = vshrl.u32 %v569, 7
      %v571 = vsub.s32 0, %v570
      %v572 = vrot.slane %v567, %v571
      %v590 = vunpack.c.l.b16 %v318
      %v591 = vunpack.c.l.b16 %v319
      %v592 = vunpack.c.l.b16 %v320
      %v593 = vunpack.c.l.b16 %v321
      %v594 = vunpack.c.l.b16 %v322
      %v595 = vunpack.c.l.b16 %v323
      %v596 = vunpack.c.l.b16 %v324
      %v597 = vunpack.c.l.b16 %v325
      %v598 = vunpack.c.l.b16 %v326
      %v599 = vunpack.c.l.b16 %v327
      %v600 = vunpack.c.l.b16 %v328
      %v601 = vunpack.c.l.b16 %v329
      %v602 = vunpack.c.l.b16 %v330
      %v603 = vunpack.c.l.b16 %v331
      %v604 = vunpack.c.l.b16 %v332
      %v605 = vunpack.c.l.b16 %v333
      %v606 = vpack.c.b16 %v591, %v590
      %v607 = vpack.c.b16 %v593, %v592
      %v608 = vpack.c.b16 %v595, %v594
      %v609 = vpack.c.b16 %v597, %v596
      %v610 = vpack.c.b16 %v599, %v598
      %v611 = vpack.c.b16 %v601, %v600
      %v612 = vpack.c.b16 %v603, %v602
      %v613 = vpack.c.b16 %v605, %v604
      %622 = vmatprep.subr.bf16.mxu0 0
      %623 = vmatpush1.bf16.msra.mxu0 %v566
      %624 = vmatprep.subr.bf16.mxu0 0
      %625 = vmatpush1.bf16.msra.mxu0 %v565
      %626 = vmatprep.subr.bf16.mxu0 0
      %627 = vmatpush1.bf16.msra.mxu0 %v564
      %628 = vmatprep.subr.bf16.mxu0 0
      %629 = vmatpush1.bf16.msra.mxu0 %v563
      %630 = vmatprep.subr.bf16.mxu0 0
      %631 = vmatpush1.bf16.msra.mxu0 %v562
      %632 = vmatprep.subr.bf16.mxu0 0
      %633 = vmatpush1.bf16.msra.mxu0 %v561
      %634 = vmatprep.subr.bf16.mxu0 0
      %635 = vmatpush1.bf16.msra.mxu0 %v560
      %636 = vmatprep.subr.bf16.mxu0 0
      %637 = vmatpush1.bf16.msra.mxu0 %v559
      %638 = vmatprep.subr.bf16.mxu0 0
      %639 = vmatpush2.bf16.msra.mxu0 0
      %640 = vmatprep.subr.bf16.mxu0 0
      %641 = vmatpush2.bf16.msra.mxu0 0
      %642 = vmatprep.subr.bf16.mxu0 0
      %643 = vmatpush2.bf16.msra.mxu0 0
      %644 = vmatprep.subr.bf16.mxu0 0
      %645 = vmatpush2.bf16.msra.mxu0 0
      %646 = vmatprep.subr.bf16.mxu0 0
      %647 = vmatpush2.bf16.msra.mxu0 0
      %648 = vmatprep.subr.bf16.mxu0 0
      %649 = vmatpush2.bf16.msra.mxu0 0
      %650 = vmatprep.subr.bf16.mxu0 0
      %651 = vmatpush2.bf16.msra.mxu0 0
      %652 = vmatprep.subr.bf16.mxu0 0
      %653 = vmatpush2.bf16.msra.mxu0 0
      %654 = vmatprep.mubr.bf16.mxu0 0
      %655 = vmatmul.mubr.bf16.gmra.mxu0 %v606
      %v656 = vpop.f32.mrf.mxu0
      %v657 = vadd.f32 %v572, %v656
      %v658 = vpop.f32.mrf.mxu0
      %v659 = vpop.f32.mrf.mxu0
      %v660 = vadd.f32 %v572, %v659
      %v661 = vpop.f32.mrf.mxu0
      %662 = vmatprep.mubr.bf16.mxu0 0
      %663 = vmatmul.mubr.bf16.gmra.mxu0 %v607
      %v664 = vpop.f32.mrf.mxu0
      %v665 = vadd.f32 %v572, %v664
      %v666 = vpop.f32.mrf.mxu0
      %v667 = vpop.f32.mrf.mxu0
      %v668 = vadd.f32 %v572, %v667
      %v669 = vpop.f32.mrf.mxu0
      %670 = vmatprep.mubr.bf16.mxu0 0
      %671 = vmatmul.mubr.bf16.gmra.mxu0 %v608
      %v672 = vpop.f32.mrf.mxu0
      %v673 = vadd.f32 %v572, %v672
      %v674 = vpop.f32.mrf.mxu0
      %v675 = vpop.f32.mrf.mxu0
      %v676 = vadd.f32 %v572, %v675
      %v677 = vpop.f32.mrf.mxu0
      %678 = vmatprep.mubr.bf16.mxu0 0
      %679 = vmatmul.mubr.bf16.gmra.mxu0 %v609
      %v680 = vpop.f32.mrf.mxu0
      %v681 = vadd.f32 %v572, %v680
      %v682 = vpop.f32.mrf.mxu0
      %v683 = vpop.f32.mrf.mxu0
      %v684 = vadd.f32 %v572, %v683
      %v685 = vpop.f32.mrf.mxu0
      %686 = vmatprep.mubr.bf16.mxu0 0
      %687 = vmatmul.mubr.bf16.gmra.mxu0 %v610
      %v688 = vpop.f32.mrf.mxu0
      %v689 = vadd.f32 %v572, %v688
      %v690 = vpop.f32.mrf.mxu0
      %v691 = vpop.f32.mrf.mxu0
      %v692 = vadd.f32 %v572, %v691
      %v693 = vpop.f32.mrf.mxu0
      %694 = vmatprep.mubr.bf16.mxu0 0
      %695 = vmatmul.mubr.bf16.gmra.mxu0 %v611
      %v696 = vpop.f32.mrf.mxu0
      %v697 = vadd.f32 %v572, %v696
      %v698 = vpop.f32.mrf.mxu0
      %v699 = vpop.f32.mrf.mxu0
      %v700 = vadd.f32 %v572, %v699
      %v701 = vpop.f32.mrf.mxu0
      %702 = vmatprep.mubr.bf16.mxu0 0
      %703 = vmatmul.mubr.bf16.gmra.mxu0 %v612
      %v704 = vpop.f32.mrf.mxu0
      %v705 = vadd.f32 %v572, %v704
      %v706 = vpop.f32.mrf.mxu0
      %v707 = vpop.f32.mrf.mxu0
      %v708 = vadd.f32 %v572, %v707
      %v709 = vpop.f32.mrf.mxu0
      %710 = vmatprep.mubr.bf16.mxu0 0
      %711 = vmatmul.mubr.bf16.gmra.mxu0 %v613
      %v712 = vpop.f32.mrf.mxu0
      %v713 = vadd.f32 %v572, %v712
      %v714 = vpop.f32.mrf.mxu0
      %v715 = vpop.f32.mrf.mxu0
      %v716 = vadd.f32 %v572, %v715
      %v717 = vpop.f32.mrf.mxu0
      %718 = vdwg.mxu0
      %v719 = vmax.f32 %v657, 0.0
      %v720 = vmax.f32 %v660, 0.0
      %v721 = vmax.f32 %v665, 0.0
      %v722 = vmax.f32 %v668, 0.0
      %v723 = vmax.f32 %v673, 0.0
      %v724 = vmax.f32 %v676, 0.0
      %v725 = vmax.f32 %v681, 0.0
      %v726 = vmax.f32 %v684, 0.0
      %v727 = vmax.f32 %v689, 0.0
      %v728 = vmax.f32 %v692, 0.0
      %v729 = vmax.f32 %v697, 0.0
      %v730 = vmax.f32 %v700, 0.0
      %v731 = vmax.f32 %v705, 0.0
      %v732 = vmax.f32 %v708, 0.0
      %v733 = vmax.f32 %v713, 0.0
      %v734 = vmax.f32 %v716, 0.0
      %v735 = vpack.c.bf16 %v720, %v719
      %v736 = vpack.c.bf16 %v722, %v721
      %v737 = vpack.c.bf16 %v724, %v723
      %v738 = vpack.c.bf16 %v726, %v725
      %v739 = vpack.c.bf16 %v728, %v727
      %v740 = vpack.c.bf16 %v730, %v729
      %v741 = vpack.c.bf16 %v732, %v731
      %v742 = vpack.c.bf16 %v734, %v733
      %v743 = vld [vmem:[%s4] sm:$0xf]
      %v744 = vld [vmem:[%s4 + $0x4] sm:$0xf]
      %v745 = vld [vmem:[%s4 + $0x8] sm:$0xf]
      %v746 = vld [vmem:[%s4 + $0xc] sm:$0xf]
      %v747 = vld [vmem:[%s4 + $0x10] sm:$0xf]
      %v748 = vld [vmem:[%s4 + $0x14] sm:$0xf]
      %v749 = vld [vmem:[%s4 + $0x18] sm:$0xf]
      %v750 = vld [vmem:[%s4 + $0x1c] sm:$0xf]
      %v751 = vld [vmem:[%s4 + $0x20] sm:$0xf]
      %v752 = vld [vmem:[%s4 + $0x24] sm:$0xf]
      %v753 = vld [vmem:[%s4 + $0x28] sm:$0xf]
      %v754 = vld [vmem:[%s4 + $0x2c] sm:$0xf]
      %v755 = vld [vmem:[%s4 + $0x30] sm:$0xf]
      %v756 = vld [vmem:[%s4 + $0x34] sm:$0xf]
      %v757 = vld [vmem:[%s4 + $0x38] sm:$0xf]
      %v758 = vld [vmem:[%s4 + $0x3c] sm:$0xf]
      %v775 = vunpack.c.l.b16 %v743
      %v776 = vunpack.c.l.b16 %v744
      %v777 = vunpack.c.l.b16 %v745
      %v778 = vunpack.c.l.b16 %v746
      %v779 = vunpack.c.l.b16 %v747
      %v780 = vunpack.c.l.b16 %v748
      %v781 = vunpack.c.l.b16 %v749
      %v782 = vunpack.c.l.b16 %v750
      %v783 = vunpack.c.l.b16 %v751
      %v784 = vunpack.c.l.b16 %v752
      %v785 = vunpack.c.l.b16 %v753
      %v786 = vunpack.c.l.b16 %v754
      %v787 = vunpack.c.l.b16 %v755
      %v788 = vunpack.c.l.b16 %v756
      %v789 = vunpack.c.l.b16 %v757
      %v790 = vunpack.c.l.b16 %v758
      %v791 = vpack.c.b16 %v776, %v775
      %v792 = vpack.c.b16 %v778, %v777
      %v793 = vpack.c.b16 %v780, %v779
      %v794 = vpack.c.b16 %v782, %v781
      %v795 = vpack.c.b16 %v784, %v783
      %v796 = vpack.c.b16 %v786, %v785
      %v797 = vpack.c.b16 %v788, %v787
      %v798 = vpack.c.b16 %v790, %v789
      %807 = vmatprep.subr.bf16.mxu0 0
      %808 = vmatpush1.bf16.msra.mxu0 %v798
      %809 = vmatprep.subr.bf16.mxu0 0
      %810 = vmatpush1.bf16.msra.mxu0 %v797
      %811 = vmatprep.subr.bf16.mxu0 0
      %812 = vmatpush1.bf16.msra.mxu0 %v796
      %813 = vmatprep.subr.bf16.mxu0 0
      %814 = vmatpush1.bf16.msra.mxu0 %v795
      %815 = vmatprep.subr.bf16.mxu0 0
      %816 = vmatpush1.bf16.msra.mxu0 %v794
      %817 = vmatprep.subr.bf16.mxu0 0
      %818 = vmatpush1.bf16.msra.mxu0 %v793
      %819 = vmatprep.subr.bf16.mxu0 0
      %820 = vmatpush1.bf16.msra.mxu0 %v792
      %821 = vmatprep.subr.bf16.mxu0 0
      %822 = vmatpush1.bf16.msra.mxu0 %v791
      %823 = vmatprep.subr.bf16.mxu0 0
      %824 = vmatpush2.bf16.msra.mxu0 0
      %825 = vmatprep.subr.bf16.mxu0 0
      %826 = vmatpush2.bf16.msra.mxu0 0
      %827 = vmatprep.subr.bf16.mxu0 0
      %828 = vmatpush2.bf16.msra.mxu0 0
      %829 = vmatprep.subr.bf16.mxu0 0
      %830 = vmatpush2.bf16.msra.mxu0 0
      %831 = vmatprep.subr.bf16.mxu0 0
      %832 = vmatpush2.bf16.msra.mxu0 0
      %833 = vmatprep.subr.bf16.mxu0 0
      %834 = vmatpush2.bf16.msra.mxu0 0
      %835 = vmatprep.subr.bf16.mxu0 0
      %836 = vmatpush2.bf16.msra.mxu0 0
      %837 = vmatprep.subr.bf16.mxu0 0
      %838 = vmatpush2.bf16.msra.mxu0 0
      %839 = vmatprep.mubr.bf16.mxu0 0
      %840 = vmatmul.mubr.bf16.gmra.mxu0 %v735
      %v841 = vpop.f32.mrf.mxu0
      %v842 = vadd.f32 0.0, %v841
      %v843 = vpop.f32.mrf.mxu0
      %v844 = vpop.f32.mrf.mxu0
      %v845 = vadd.f32 0.0, %v844
      %v846 = vpop.f32.mrf.mxu0
      %847 = vmatprep.mubr.bf16.mxu0 0
      %848 = vmatmul.mubr.bf16.gmra.mxu0 %v736
      %v849 = vpop.f32.mrf.mxu0
      %v850 = vadd.f32 0.0, %v849
      %v851 = vpop.f32.mrf.mxu0
      %v852 = vpop.f32.mrf.mxu0
      %v853 = vadd.f32 0.0, %v852
      %v854 = vpop.f32.mrf.mxu0
      %855 = vmatprep.mubr.bf16.mxu0 0
      %856 = vmatmul.mubr.bf16.gmra.mxu0 %v737
      %v857 = vpop.f32.mrf.mxu0
      %v858 = vadd.f32 0.0, %v857
      %v859 = vpop.f32.mrf.mxu0
      %v860 = vpop.f32.mrf.mxu0
      %v861 = vadd.f32 0.0, %v860
      %v862 = vpop.f32.mrf.mxu0
      %863 = vmatprep.mubr.bf16.mxu0 0
      %864 = vmatmul.mubr.bf16.gmra.mxu0 %v738
      %v865 = vpop.f32.mrf.mxu0
      %v866 = vadd.f32 0.0, %v865
      %v867 = vpop.f32.mrf.mxu0
      %v868 = vpop.f32.mrf.mxu0
      %v869 = vadd.f32 0.0, %v868
      %v870 = vpop.f32.mrf.mxu0
      %871 = vmatprep.mubr.bf16.mxu0 0
      %872 = vmatmul.mubr.bf16.gmra.mxu0 %v739
      %v873 = vpop.f32.mrf.mxu0
      %v874 = vadd.f32 0.0, %v873
      %v875 = vpop.f32.mrf.mxu0
      %v876 = vpop.f32.mrf.mxu0
      %v877 = vadd.f32 0.0, %v876
      %v878 = vpop.f32.mrf.mxu0
      %879 = vmatprep.mubr.bf16.mxu0 0
      %880 = vmatmul.mubr.bf16.gmra.mxu0 %v740
      %v881 = vpop.f32.mrf.mxu0
      %v882 = vadd.f32 0.0, %v881
      %v883 = vpop.f32.mrf.mxu0
      %v884 = vpop.f32.mrf.mxu0
      %v885 = vadd.f32 0.0, %v884
      %v886 = vpop.f32.mrf.mxu0
      %887 = vmatprep.mubr.bf16.mxu0 0
      %888 = vmatmul.mubr.bf16.gmra.mxu0 %v741
      %v889 = vpop.f32.mrf.mxu0
      %v890 = vadd.f32 0.0, %v889
      %v891 = vpop.f32.mrf.mxu0
      %v892 = vpop.f32.mrf.mxu0
      %v893 = vadd.f32 0.0, %v892
      %v894 = vpop.f32.mrf.mxu0
      %895 = vmatprep.mubr.bf16.mxu0 0
      %896 = vmatmul.mubr.bf16.gmra.mxu0 %v742
      %v897 = vpop.f32.mrf.mxu0
      %v898 = vadd.f32 0.0, %v897
      %v899 = vpop.f32.mrf.mxu0
      %v900 = vpop.f32.mrf.mxu0
      %v901 = vadd.f32 0.0, %v900
      %v902 = vpop.f32.mrf.mxu0
      %903 = vdwg.mxu0
      %v904 = vpack.c.bf16 %v845, %v842
      %v905 = vpack.c.bf16 %v853, %v850
      %v906 = vpack.c.bf16 %v861, %v858
      %v907 = vpack.c.bf16 %v869, %v866
      %v908 = vpack.c.bf16 %v877, %v874
      %v909 = vpack.c.bf16 %v885, %v882
      %v910 = vpack.c.bf16 %v893, %v890
      %v911 = vpack.c.bf16 %v901, %v898
      %v912 = vld [vmem:[%s5] sm:$0x1]
      %v914 = vlaneseq
      %v915 = vshrl.u32 %v914, 7
      %v916 = vsub.s32 0, %v915
      %v917 = vrot.slane %v912, %v916
      %919 = vmatprep.subr.bf16.mxu0 0
      %920 = vmatpush1.bf16.msra.mxu0 %v911
      %921 = vmatprep.subr.bf16.mxu0 0
      %922 = vmatpush1.bf16.msra.mxu0 %v910
      %923 = vmatprep.subr.bf16.mxu0 0
      %924 = vmatpush1.bf16.msra.mxu0 %v909
      %925 = vmatprep.subr.bf16.mxu0 0
      %926 = vmatpush1.bf16.msra.mxu0 %v908
      %927 = vmatprep.subr.bf16.mxu0 0
      %928 = vmatpush1.bf16.msra.mxu0 %v907
      %929 = vmatprep.subr.bf16.mxu0 0
      %930 = vmatpush1.bf16.msra.mxu0 %v906
      %931 = vmatprep.subr.bf16.mxu0 0
      %932 = vmatpush1.bf16.msra.mxu0 %v905
      %933 = vmatprep.subr.bf16.mxu0 0
      %934 = vmatpush1.bf16.msra.mxu0 %v904
      %935 = vmatprep.subr.bf16.mxu0 0
      %936 = vmatpush2.bf16.msra.mxu0 0
      %937 = vmatprep.subr.bf16.mxu0 0
      %938 = vmatpush2.bf16.msra.mxu0 0
      %939 = vmatprep.subr.bf16.mxu0 0
      %940 = vmatpush2.bf16.msra.mxu0 0
      %941 = vmatprep.subr.bf16.mxu0 0
      %942 = vmatpush2.bf16.msra.mxu0 0
      %943 = vmatprep.subr.bf16.mxu0 0
      %944 = vmatpush2.bf16.msra.mxu0 0
      %945 = vmatprep.subr.bf16.mxu0 0
      %946 = vmatpush2.bf16.msra.mxu0 0
      %947 = vmatprep.subr.bf16.mxu0 0
      %948 = vmatpush2.bf16.msra.mxu0 0
      %949 = vmatprep.subr.bf16.mxu0 0
      %950 = vmatpush2.bf16.msra.mxu0 0
      %951 = vmatprep.mubr.bf16.mxu0 0
      %952 = vmatmul.mubr.bf16.gmra.mxu0 %v606
      %v953 = vpop.f32.mrf.mxu0
      %v954 = vadd.f32 %v917, %v953
      %v955 = vpop.f32.mrf.mxu0
      %v956 = vpop.f32.mrf.mxu0
      %v957 = vadd.f32 %v917, %v956
      %v958 = vpop.f32.mrf.mxu0
      %959 = vmatprep.mubr.bf16.mxu0 0
      %960 = vmatmul.mubr.bf16.gmra.mxu0 %v607
      %v961 = vpop.f32.mrf.mxu0
      %v962 = vadd.f32 %v917, %v961
      %v963 = vpop.f32.mrf.mxu0
      %v964 = vpop.f32.mrf.mxu0
      %v965 = vadd.f32 %v917, %v964
      %v966 = vpop.f32.mrf.mxu0
      %967 = vmatprep.mubr.bf16.mxu0 0
      %968 = vmatmul.mubr.bf16.gmra.mxu0 %v608
      %v969 = vpop.f32.mrf.mxu0
      %v970 = vadd.f32 %v917, %v969
      %v971 = vpop.f32.mrf.mxu0
      %v972 = vpop.f32.mrf.mxu0
      %v973 = vadd.f32 %v917, %v972
      %v974 = vpop.f32.mrf.mxu0
      %975 = vmatprep.mubr.bf16.mxu0 0
      %976 = vmatmul.mubr.bf16.gmra.mxu0 %v609
      %v977 = vpop.f32.mrf.mxu0
      %v978 = vadd.f32 %v917, %v977
      %v979 = vpop.f32.mrf.mxu0
      %v980 = vpop.f32.mrf.mxu0
      %v981 = vadd.f32 %v917, %v980
      %v982 = vpop.f32.mrf.mxu0
      %983 = vmatprep.mubr.bf16.mxu0 0
      %984 = vmatmul.mubr.bf16.gmra.mxu0 %v610
      %v985 = vpop.f32.mrf.mxu0
      %v986 = vadd.f32 %v917, %v985
      %v987 = vpop.f32.mrf.mxu0
      %v988 = vpop.f32.mrf.mxu0
      %v989 = vadd.f32 %v917, %v988
      %v990 = vpop.f32.mrf.mxu0
      %991 = vmatprep.mubr.bf16.mxu0 0
      %992 = vmatmul.mubr.bf16.gmra.mxu0 %v611
      %v993 = vpop.f32.mrf.mxu0
      %v994 = vadd.f32 %v917, %v993
      %v995 = vpop.f32.mrf.mxu0
      %v996 = vpop.f32.mrf.mxu0
      %v997 = vadd.f32 %v917, %v996
      %v998 = vpop.f32.mrf.mxu0
      %999 = vmatprep.mubr.bf16.mxu0 0
      %1000 = vmatmul.mubr.bf16.gmra.mxu0 %v612
      %v1001 = vpop.f32.mrf.mxu0
      %v1002 = vadd.f32 %v917, %v1001
      %v1003 = vpop.f32.mrf.mxu0
      %v1004 = vpop.f32.mrf.mxu0
      %v1005 = vadd.f32 %v917, %v1004
      %v1006 = vpop.f32.mrf.mxu0
      %1007 = vmatprep.mubr.bf16.mxu0 0
      %1008 = vmatmul.mubr.bf16.gmra.mxu0 %v613
      %v1009 = vpop.f32.mrf.mxu0
      %v1010 = vadd.f32 %v917, %v1009
      %v1011 = vpop.f32.mrf.mxu0
      %v1012 = vpop.f32.mrf.mxu0
      %v1013 = vadd.f32 %v917, %v1012
      %v1014 = vpop.f32.mrf.mxu0
      %1015 = vdwg.mxu0
      %1016 = vst [vmem:[%s312] sm:$0xff] %v954
      %1017 = vst [vmem:[%s312 + $0x8] sm:$0xff] %v957
      %1018 = vst [vmem:[%s312 + $0x10] sm:$0xff] %v962
      %1019 = vst [vmem:[%s312 + $0x18] sm:$0xff] %v965
      %1020 = vst [vmem:[%s312 + $0x20] sm:$0xff] %v970
      %1021 = vst [vmem:[%s312 + $0x28] sm:$0xff] %v973
      %1022 = vst [vmem:[%s312 + $0x30] sm:$0xff] %v978
      %1023 = vst [vmem:[%s312 + $0x38] sm:$0xff] %v981
      %1024 = vst [vmem:[%s312 + $0x40] sm:$0xff] %v986
      %1025 = vst [vmem:[%s312 + $0x48] sm:$0xff] %v989
      %1026 = vst [vmem:[%s312 + $0x50] sm:$0xff] %v994
      %1027 = vst [vmem:[%s312 + $0x58] sm:$0xff] %v997
      %1028 = vst [vmem:[%s312 + $0x60] sm:$0xff] %v1002
      %1029 = vst [vmem:[%s312 + $0x68] sm:$0xff] %v1005
      %1030 = vst [vmem:[%s312 + $0x70] sm:$0xff] %v1010
      %1031 = vst [vmem:[%s312 + $0x78] sm:$0xff] %v1013
      %v1032 = vld [vmem:[%s6] sm:$0xf]
      %v1033 = vpack.c.bf16 %v957, %v954
      %v1034 = vpack.c.bf16 %v965, %v962
      %v1035 = vpack.c.bf16 %v973, %v970
      %v1036 = vpack.c.bf16 %v981, %v978
      %v1037 = vpack.c.bf16 %v989, %v986
      %v1038 = vpack.c.bf16 %v997, %v994
      %v1039 = vpack.c.bf16 %v1005, %v1002
      %v1040 = vpack.c.bf16 %v1013, %v1010
      %1041 = vmatprep.subr.bf16.mxu0 0
      %1042 = vmatpush1.bf16.msra.mxu0 %v1040
      %1043 = vmatprep.subr.bf16.mxu0 0
      %1044 = vmatpush1.bf16.msra.mxu0 %v1039
      %1045 = vmatprep.subr.bf16.mxu0 0
      %1046 = vmatpush1.bf16.msra.mxu0 %v1038
      %1047 = vmatprep.subr.bf16.mxu0 0
      %1048 = vmatpush1.bf16.msra.mxu0 %v1037
      %1049 = vmatprep.subr.bf16.mxu0 0
      %1050 = vmatpush1.bf16.msra.mxu0 %v1036
      %1051 = vmatprep.subr.bf16.mxu0 0
      %1052 = vmatpush1.bf16.msra.mxu0 %v1035
      %1053 = vmatprep.subr.bf16.mxu0 0
      %1054 = vmatpush1.bf16.msra.mxu0 %v1034
      %1055 = vmatprep.subr.bf16.mxu0 0
      %1056 = vmatpush1.bf16.msra.mxu0 %v1033
      %1057 = vmatprep.subr.bf16.mxu0 0
      %1058 = vmatpush2.bf16.msra.mxu0 0
      %1059 = vmatprep.subr.bf16.mxu0 0
      %1060 = vmatpush2.bf16.msra.mxu0 0
      %1061 = vmatprep.subr.bf16.mxu0 0
      %1062 = vmatpush2.bf16.msra.mxu0 0
      %1063 = vmatprep.subr.bf16.mxu0 0
      %1064 = vmatpush2.bf16.msra.mxu0 0
      %1065 = vmatprep.subr.bf16.mxu0 0
      %1066 = vmatpush2.bf16.msra.mxu0 0
      %1067 = vmatprep.subr.bf16.mxu0 0
      %1068 = vmatpush2.bf16.msra.mxu0 0
      %1069 = vmatprep.subr.bf16.mxu0 0
      %1070 = vmatpush2.bf16.msra.mxu0 0
      %1071 = vmatprep.subr.bf16.mxu0 0
      %1072 = vmatpush2.bf16.msra.mxu0 0
      %1073 = vmatprep.mubr.bf16.mxu0 0
      %1074 = vmatmul.mubr.bf16.gmra.mxu0 %v1032
      %v1075 = vpop.f32.mrf.mxu0
      %v1076 = vadd.f32 0.0, %v1075
      %v1077 = vpop.f32.mrf.mxu0
      %v1078 = vpop.f32.mrf.mxu0
      %v1079 = vpop.f32.mrf.mxu0
      %1080 = vdwg.mxu0
      %1081 = vst [vmem:[%s316] sm:$0xff] %v1076
      %p1082 = scmp.lt.s32.totalorder %s20, 1
      %s1083 = scalar_select %p1082, %s20, 1
      %s1084 = smul.addr %s1083, 16
      %s1085 = smul.addr %s1084, 8
      %s1086 = scalar_lea.vmem %s7, %s1085
      %p1087 = scmp.lt.s32.totalorder %s20, 1
      %s1088 = scalar_select %p1087, %s20, 1
      %s1089 = smul.addr %s1088, 8
      %s1090 = scalar_lea.vmem %s8, %s1089
      // Predicated region
      $region49: #{encoder_forward.1} parent=47 // pred_check
        %p1091 = pneg %p190
      $region50: #{encoder_forward.1} parent=47 // pred_check_branch
        %1093 = sbr.rel (%p1091) target = $region52
      $region51: #{encoder_forward.1} parent=47 // pred_region
        _
      $region52: #{encoder_forward.1} parent=47 // pred_fallthru
        _
      // Predicated region
      $region53: #{encoder_forward.1} parent=47 // pred_check
        %p1094 = pneg %p216
      $region54: #{encoder_forward.1} parent=47 // pred_check_branch
        %1096 = sbr.rel (%p1094) target = $region56
      $region55: #{encoder_forward.1} parent=47 // pred_region
        _
      $region56: #{encoder_forward.1} parent=47 // pred_fallthru
        _
    $region48: #{encoder_forward.1} parent=5 // pred_fallthru
      _
    %p1097 = scmp.le.s32.totalorder 2, %s15
    // Predicated region
    $region57: #{encoder_forward.1} parent=5 // pred_check
      %p1098 = pneg %p1097
    $region58: #{encoder_forward.1} parent=5 // pred_check_branch
      %1100 = sbr.rel (%p1098) target = $region60
    $region59: #{encoder_forward.1} parent=5 // pred_region
      %s1101 = ssub.s32 %s15, 2
      // Predicated region
      $region61: #{encoder_forward.1} parent=59 // pred_check
        %p1102 = pneg %p196
      $region62: #{encoder_forward.1} parent=59 // pred_check_branch
        %1104 = sbr.rel (%p1102) target = $region64
      $region63: #{encoder_forward.1} parent=59 // pred_region
        %p1105 = scmp.lt.s32.totalorder %s21, 1
        %s1106 = scalar_select %p1105, %s21, 1
        %s1107 = smul.addr %s1106, 16
        %s1108 = smul.addr %s1107, 8
        %s1109 = scalar_lea.vmem %s7, %s1108
      $region64: #{encoder_forward.1} parent=59 // pred_fallthru
        _
      // Predicated region
      $region65: #{encoder_forward.1} parent=59 // pred_check
        %p1110 = pneg %p222
      $region66: #{encoder_forward.1} parent=59 // pred_check_branch
        %1112 = sbr.rel (%p1110) target = $region68
      $region67: #{encoder_forward.1} parent=59 // pred_region
        %p1113 = scmp.lt.s32.totalorder %s21, 1
        %s1114 = scalar_select %p1113, %s21, 1
        %s1115 = smul.addr %s1114, 8
        %s1116 = scalar_lea.vmem %s8, %s1115
      $region68: #{encoder_forward.1} parent=59 // pred_fallthru
        _
    $region60: #{encoder_forward.1} parent=5 // pred_fallthru
      _
  $region6: #{encoder_forward.1} parent=0 // loop_footer
    %s19 = sadd.s32 1, %s15
  $region7: #{encoder_forward.1} parent=0 // loop_footer_branch
    %14 = sbr.rel target = $region3
  $region8: #{encoder_forward.1} parent=0 // loop_exit
    _

</llo_original>
